<compile_context>
chip_gen: v7x
topology: tpu7x:2x2x1
jax: 0.10.0
libtpu: 0.0.40
codegen_flags: <defaults>
</compile_context>

<pallas_src>
import numpy as np
import jax
import jax.numpy as jnp
from jax.experimental import pallas as pl
from jax.experimental.pallas import tpu as pltpu


def _conv_stats_kernel(xp_ref, w_ref, b_ref, conv_ref, s_ref, ss_ref):
    """Conv1d (k=3, circular-padded input) + per-channel partial BN stats.

    xp_ref:   [L+4, C]   circularly padded input row (one batch element)
    w_ref:    [3, C, C]  per-tap weights, [tap, c_in, c_out], float32
    b_ref:    [1, C]     conv bias
    conv_ref: [L_conv, C] conv output (f32)
    s_ref:    [1, C]     sum over L_conv of conv output
    ss_ref:   [1, C]     sum of squares over L_conv of conv output
    """
    l_conv = conv_ref.shape[0]
    acc = jnp.zeros(conv_ref.shape, jnp.float32)
    for k in range(3):  # static unroll over the 3 taps
        acc = acc + jnp.dot(
            xp_ref[k:k + l_conv, :].astype(jnp.float32),
            w_ref[k],
            preferred_element_type=jnp.float32,
        )
    acc = acc + b_ref[...]
    conv_ref[...] = acc
    s_ref[...] = jnp.sum(acc, axis=0, keepdims=True)
    ss_ref[...] = jnp.sum(acc * acc, axis=0, keepdims=True)


def _bn_elu_pool_kernel(conv_ref, scale_ref, shift_ref, o_ref):
    """Fused BatchNorm-apply + ELU + MaxPool1d(k=3, s=2, p=1).

    conv_ref:  [L_conv, C] f32
    scale_ref: [1, C]  = gamma / sqrt(var + eps)
    shift_ref: [1, C]  = beta - mean * scale
    o_ref:     [L_pool, C]
    """
    l_conv, c = conv_ref.shape
    l_pool = o_ref.shape[0]

    y = conv_ref[...] * scale_ref[...] + shift_ref[...]
    # ELU (alpha = 1)
    y = jnp.where(y > 0, y, jnp.exp(jnp.minimum(y, 0.0)) - 1.0)

    # MaxPool1d(k=3, stride=2, padding=1) with implicit -inf padding.
    neg = jnp.full((1, c), -jnp.inf, dtype=jnp.float32)
    ap = jnp.concatenate([neg, y, neg], axis=0)                      # [L_conv+2, C]
    m = jnp.maximum(
        jnp.maximum(ap[0:l_conv, :], ap[1:l_conv + 1, :]), ap[2:l_conv + 2, :]
    )                                                                # m[l] = max over window l
    # stride-2 downsample: y_pool[t] = m[2t], via one-hot selection matmul (MXU).
    rows = jax.lax.broadcasted_iota(jnp.int32, (l_pool, l_conv), 0)
    cols = jax.lax.broadcasted_iota(jnp.int32, (l_pool, l_conv), 1)
    sel = (cols == 2 * rows).astype(jnp.float32)
    o_ref[...] = jnp.dot(sel, m, preferred_element_type=jnp.float32).astype(o_ref.dtype)


def conv_layer_forward(x, w, b, gamma, beta, eps=1e-5):
    """ConvLayer.forward.  x: [B, L, C]; w: [C_out, C_in, 3] (torch layout);
    b, gamma, beta: [C].  Returns [B, L_pool, C]."""
    B, L, C = x.shape
    L_conv = L + 2                     # Conv1d(k=3, padding=2, circular), stride 1
    L_pool = (L_conv - 1) // 2 + 1     # MaxPool1d(k=3, stride=2, padding=1)
    f32 = jnp.float32

    # Circular padding (2 each side) along L, channels-last.
    xp = jnp.concatenate([x[:, -2:, :], x, x[:, :2, :]], axis=1).astype(f32)  # [B, L+4, C]
    # Keep weights in f32 regardless of x dtype; accumulate in f32 on the MXU.
    w_taps = jnp.transpose(w.astype(f32), (2, 1, 0))                          # [3, C_in, C_out]
    bias = b.astype(f32).reshape(1, C)

    conv_out, psum, psumsq = pl.pallas_call(
        _conv_stats_kernel,
        out_shape=(
            jax.ShapeDtypeStruct((B, L_conv, C), f32),
            jax.ShapeDtypeStruct((B, 1, C), f32),
            jax.ShapeDtypeStruct((B, 1, C), f32),
        ),
        grid_spec=pl.GridSpec(
            grid=(B,),
            in_specs=[
                pl.BlockSpec((None, L + 4, C), lambda i: (i, 0, 0)),
                pl.BlockSpec((3, C, C), lambda i: (0, 0, 0)),   # resident weights
                pl.BlockSpec((1, C), lambda i: (0, 0)),
            ],
            out_specs=(
                pl.BlockSpec((None, L_conv, C), lambda i: (i, 0, 0)),
                pl.BlockSpec((None, 1, C), lambda i: (i, 0, 0)),
                pl.BlockSpec((None, 1, C), lambda i: (i, 0, 0)),
            ),
        ),
        compiler_params=pltpu.CompilerParams(dimension_semantics=("parallel",)),
    )(xp, w_taps, bias)

    # Finalize BatchNorm1d statistics (training-mode batch stats, biased variance).
    # TODO(synk): running_mean/running_var state updates (a training side effect)
    # are not modeled; only the forward output is produced.
    n = B * L_conv
    mean = jnp.sum(psum, axis=0) / n                         # [1, C]
    var = jnp.maximum(jnp.sum(psumsq, axis=0) / n - mean * mean, 0.0)
    scale = gamma.astype(f32).reshape(1, C) * jax.lax.rsqrt(var + eps)
    shift = beta.astype(f32).reshape(1, C) - mean * scale

    out = pl.pallas_call(
        _bn_elu_pool_kernel,
        out_shape=jax.ShapeDtypeStruct((B, L_pool, C), x.dtype),
        grid_spec=pl.GridSpec(
            grid=(B,),
            in_specs=[
                pl.BlockSpec((None, L_conv, C), lambda i: (i, 0, 0)),
                pl.BlockSpec((1, C), lambda i: (0, 0)),
                pl.BlockSpec((1, C), lambda i: (0, 0)),
            ],
            out_specs=pl.BlockSpec((None, L_pool, C), lambda i: (i, 0, 0)),
        ),
        compiler_params=pltpu.CompilerParams(dimension_semantics=("parallel",)),
    )(conv_out, scale, shift)
    return out


def _reference_forward(x, w, b, gamma, beta, eps=1e-5):
    """Pure-JAX mirror of ConvLayer.forward (training-mode BatchNorm)."""
    B, L, C = x.shape
    xt = jnp.transpose(x, (0, 2, 1)).astype(jnp.float32)                 # [B, C, L]
    xp = jnp.concatenate([xt[:, :, -2:], xt, xt[:, :, :2]], axis=-1)     # circular pad 2
    L_conv = L + 2
    conv = jnp.zeros((B, C, L_conv), jnp.float32)
    for k in range(3):
        conv = conv + jnp.einsum(
            "bcl,oc->bol", xp[:, :, k:k + L_conv], w[:, :, k].astype(jnp.float32)
        )
    conv = conv + b.astype(jnp.float32)[None, :, None]
    mean = conv.mean(axis=(0, 2), keepdims=True)
    var = ((conv - mean) ** 2).mean(axis=(0, 2), keepdims=True)
    y = (conv - mean) * jax.lax.rsqrt(var + eps)
    y = y * gamma.astype(jnp.float32)[None, :, None] + beta.astype(jnp.float32)[None, :, None]
    y = jnp.where(y > 0, y, jnp.exp(jnp.minimum(y, 0.0)) - 1.0)          # ELU
    yp = jnp.pad(y, ((0, 0), (0, 0), (1, 1)), constant_values=-jnp.inf)  # maxpool pad
    L_pool = (L_conv - 1) // 2 + 1
    cols = [jnp.max(yp[:, :, 2 * t:2 * t + 3], axis=-1) for t in range(L_pool)]
    out = jnp.stack(cols, axis=-1)                                       # [B, C, L_pool]
    return jnp.transpose(out, (0, 2, 1)).astype(x.dtype)                 # [B, L_pool, C]


if __name__ == "__main__":
    key = jax.random.PRNGKey(0)
    B, L, C = 2, 16, 32   # x fed to ConvLayer.forward is [batch, seq_len, c_in]
    k1, k2, k3 = jax.random.split(key, 3)
    x = jax.random.normal(k1, (B, L, C), dtype=jnp.float32)

    # Conv1d(c_in, c_in, kernel_size=3) parameters, PyTorch layout [out, in, k].
    bound = 1.0 / np.sqrt(C * 3)
    w = jax.random.uniform(k2, (C, C, 3), jnp.float32, -bound, bound)
    b = jax.random.uniform(k3, (C,), jnp.float32, -bound, bound)
    gamma = jnp.ones((C,), jnp.float32)   # fresh BatchNorm1d affine params
    beta = jnp.zeros((C,), jnp.float32)

    fwd = jax.jit(conv_layer_forward)
    out = jax.block_until_ready(fwd(x, w, b, gamma, beta))
    ref = jax.block_until_ready(_reference_forward(x, w, b, gamma, beta))

    expected_shape = (B, (L + 1) // 2 + 1, C)
    ok = (
        out.shape == ref.shape == expected_shape
        and np.allclose(np.asarray(out), np.asarray(ref), atol=1e-4, rtol=1e-4)
    )
    if ok:
        print("KERNEL_OK")
</pallas_src>

<mosaic_0001>
module attributes {stable_mosaic.version = 11 : i64} {
  func.func @_conv_stats_kernel(%arg0: i32, %arg1: memref<1x20x32xf32, #tpu.memory_space<vmem>>, %arg2: memref<3x32x32xf32, #tpu.memory_space<vmem>>, %arg3: memref<1x32xf32, #tpu.memory_space<vmem>>, %arg4: memref<1x18x32xf32, #tpu.memory_space<vmem>>, %arg5: memref<1x1x32xf32, #tpu.memory_space<vmem>>, %arg6: memref<1x1x32xf32, #tpu.memory_space<vmem>>) attributes {dimension_semantics = [#tpu.dimension_semantics<parallel>], iteration_bounds = array<i64: 2>, scalar_prefetch = 0 : i64, scratch_operands = 0 : i64, tpu.core_type = #tpu.core_type<tc>, window_params = [{transform_indices = @transform_0, window_bounds = array<i64: 1, 20, 32>}, {pipeline_mode = #tpu.pipeline_mode<synchronous>, transform_indices = @transform_1, window_bounds = array<i64: 3, 32, 32>}, {pipeline_mode = #tpu.pipeline_mode<synchronous>, transform_indices = @transform_2, window_bounds = array<i64: 1, 32>}, {transform_indices = @transform_3, window_bounds = array<i64: 1, 18, 32>}, {transform_indices = @transform_4, window_bounds = array<i64: 1, 1, 32>}, {transform_indices = @transform_5, window_bounds = array<i64: 1, 1, 32>}]} {
    %cst = arith.constant 0.000000e+00 : f32
    %0 = vector.broadcast %cst : f32 to vector<18x32xf32>
    %c0 = arith.constant 0 : index
    %c0_0 = arith.constant 0 : index
    %c0_1 = arith.constant 0 : index
    %1 = vector.load %arg1[%c0, %c0_0, %c0_1] : memref<1x20x32xf32, #tpu.memory_space<vmem>>, vector<1x18x32xf32>
    %2 = vector.shape_cast %1 : vector<1x18x32xf32> to vector<18x32xf32>
    %c0_2 = arith.constant 0 : index
    %c0_3 = arith.constant 0 : index
    %c0_4 = arith.constant 0 : index
    %3 = vector.load %arg2[%c0_2, %c0_3, %c0_4] : memref<3x32x32xf32, #tpu.memory_space<vmem>>, vector<1x32x32xf32>
    %4 = vector.shape_cast %3 : vector<1x32x32xf32> to vector<32x32xf32>
    %cst_5 = arith.constant dense<0.000000e+00> : vector<18x32xf32>
    %5 = tpu.matmul %2, %4, %cst_5 {dimension_numbers = #tpu.dot_dimension_numbers<[1], [0], [0], [1], [0, 0, 1, 1], [], []>} : vector<18x32xf32>, vector<32x32xf32>, vector<18x32xf32> -> vector<18x32xf32>
    %6 = arith.addf %0, %5 : vector<18x32xf32>
    %c0_6 = arith.constant 0 : index
    %c1 = arith.constant 1 : index
    %c0_7 = arith.constant 0 : index
    %7 = vector.load %arg1[%c0_6, %c1, %c0_7] : memref<1x20x32xf32, #tpu.memory_space<vmem>>, vector<1x18x32xf32>
    %8 = vector.shape_cast %7 : vector<1x18x32xf32> to vector<18x32xf32>
    %c1_8 = arith.constant 1 : index
    %c0_9 = arith.constant 0 : index
    %c0_10 = arith.constant 0 : index
    %9 = vector.load %arg2[%c1_8, %c0_9, %c0_10] : memref<3x32x32xf32, #tpu.memory_space<vmem>>, vector<1x32x32xf32>
    %10 = vector.shape_cast %9 : vector<1x32x32xf32> to vector<32x32xf32>
    %cst_11 = arith.constant dense<0.000000e+00> : vector<18x32xf32>
    %11 = tpu.matmul %8, %10, %cst_11 {dimension_numbers = #tpu.dot_dimension_numbers<[1], [0], [0], [1], [0, 0, 1, 1], [], []>} : vector<18x32xf32>, vector<32x32xf32>, vector<18x32xf32> -> vector<18x32xf32>
    %12 = arith.addf %6, %11 : vector<18x32xf32>
    %c0_12 = arith.constant 0 : index
    %c2 = arith.constant 2 : index
    %c0_13 = arith.constant 0 : index
    %13 = vector.load %arg1[%c0_12, %c2, %c0_13] : memref<1x20x32xf32, #tpu.memory_space<vmem>>, vector<1x18x32xf32>
    %14 = vector.shape_cast %13 : vector<1x18x32xf32> to vector<18x32xf32>
    %c2_14 = arith.constant 2 : index
    %c0_15 = arith.constant 0 : index
    %c0_16 = arith.constant 0 : index
    %15 = vector.load %arg2[%c2_14, %c0_15, %c0_16] : memref<3x32x32xf32, #tpu.memory_space<vmem>>, vector<1x32x32xf32>
    %16 = vector.shape_cast %15 : vector<1x32x32xf32> to vector<32x32xf32>
    %cst_17 = arith.constant dense<0.000000e+00> : vector<18x32xf32>
    %17 = tpu.matmul %14, %16, %cst_17 {dimension_numbers = #tpu.dot_dimension_numbers<[1], [0], [0], [1], [0, 0, 1, 1], [], []>} : vector<18x32xf32>, vector<32x32xf32>, vector<18x32xf32> -> vector<18x32xf32>
    %18 = arith.addf %12, %17 : vector<18x32xf32>
    %c0_18 = arith.constant 0 : index
    %c0_19 = arith.constant 0 : index
    %19 = vector.load %arg3[%c0_18, %c0_19] : memref<1x32xf32, #tpu.memory_space<vmem>>, vector<1x32xf32>
    %20 = vector.broadcast %19 : vector<1x32xf32> to vector<18x32xf32>
    %21 = arith.addf %18, %20 : vector<18x32xf32>
    %c0_20 = arith.constant 0 : index
    %c0_21 = arith.constant 0 : index
    %c0_22 = arith.constant 0 : index
    %22 = vector.load %arg4[%c0_20, %c0_21, %c0_22] : memref<1x18x32xf32, #tpu.memory_space<vmem>>, vector<1x18x32xf32>
    %23 = vector.shape_cast %22 : vector<1x18x32xf32> to vector<18x32xf32>
    %24 = vector.shape_cast %21 : vector<18x32xf32> to vector<1x18x32xf32>
    tpu.vector_store %arg4[%c0_20, %c0_21, %c0_22], %24 {strides = array<i32>} : memref<1x18x32xf32, #tpu.memory_space<vmem>>, vector<1x18x32xf32>,
    %cst_23 = arith.constant dense<0.000000e+00> : vector<32xf32>
    %25 = vector.multi_reduction <add>, %21, %cst_23 [0] : vector<18x32xf32> to vector<32xf32>
    %26 = vector.shape_cast %25 : vector<32xf32> to vector<1x32xf32>
    %c0_24 = arith.constant 0 : index
    %c0_25 = arith.constant 0 : index
    %c0_26 = arith.constant 0 : index
    %27 = vector.load %arg5[%c0_24, %c0_25, %c0_26] : memref<1x1x32xf32, #tpu.memory_space<vmem>>, vector<1x1x32xf32>
    %28 = vector.shape_cast %27 : vector<1x1x32xf32> to vector<1x32xf32>
    %29 = vector.shape_cast %26 : vector<1x32xf32> to vector<1x1x32xf32>
    tpu.vector_store %arg5[%c0_24, %c0_25, %c0_26], %29 {strides = array<i32>} : memref<1x1x32xf32, #tpu.memory_space<vmem>>, vector<1x1x32xf32>,
    %30 = arith.mulf %21, %21 : vector<18x32xf32>
    %cst_27 = arith.constant dense<0.000000e+00> : vector<32xf32>
    %31 = vector.multi_reduction <add>, %30, %cst_27 [0] : vector<18x32xf32> to vector<32xf32>
    %32 = vector.shape_cast %31 : vector<32xf32> to vector<1x32xf32>
    %c0_28 = arith.constant 0 : index
    %c0_29 = arith.constant 0 : index
    %c0_30 = arith.constant 0 : index
    %33 = vector.load %arg6[%c0_28, %c0_29, %c0_30] : memref<1x1x32xf32, #tpu.memory_space<vmem>>, vector<1x1x32xf32>
    %34 = vector.shape_cast %33 : vector<1x1x32xf32> to vector<1x32xf32>
    %35 = vector.shape_cast %32 : vector<1x32xf32> to vector<1x1x32xf32>
    tpu.vector_store %arg6[%c0_28, %c0_29, %c0_30], %35 {strides = array<i32>} : memref<1x1x32xf32, #tpu.memory_space<vmem>>, vector<1x1x32xf32>,
    return
  }
  func.func @transform_0(%arg0: i32) -> (i32, i32, i32) {
    %c0_i32 = arith.constant 0 : i32
    %c0_i32_0 = arith.constant 0 : i32
    %c0_i32_1 = arith.constant 0 : i32
    return %arg0, %c0_i32, %c0_i32_0 : i32, i32, i32
  }
  func.func @transform_1(%arg0: i32) -> (i32, i32, i32) {
    %c0_i32 = arith.constant 0 : i32
    %c0_i32_0 = arith.constant 0 : i32
    %c0_i32_1 = arith.constant 0 : i32
    %c0_i32_2 = arith.constant 0 : i32
    return %c0_i32, %c0_i32_0, %c0_i32_1 : i32, i32, i32
  }
  func.func @transform_2(%arg0: i32) -> (i32, i32) {
    %c0_i32 = arith.constant 0 : i32
    %c0_i32_0 = arith.constant 0 : i32
    %c0_i32_1 = arith.constant 0 : i32
    return %c0_i32, %c0_i32_0 : i32, i32
  }
  func.func @transform_3(%arg0: i32) -> (i32, i32, i32) {
    %c0_i32 = arith.constant 0 : i32
    %c0_i32_0 = arith.constant 0 : i32
    %c0_i32_1 = arith.constant 0 : i32
    return %arg0, %c0_i32, %c0_i32_0 : i32, i32, i32
  }
  func.func @transform_4(%arg0: i32) -> (i32, i32, i32) {
    %c0_i32 = arith.constant 0 : i32
    %c0_i32_0 = arith.constant 0 : i32
    %c0_i32_1 = arith.constant 0 : i32
    return %arg0, %c0_i32, %c0_i32_0 : i32, i32, i32
  }
  func.func @transform_5(%arg0: i32) -> (i32, i32, i32) {
    %c0_i32 = arith.constant 0 : i32
    %c0_i32_0 = arith.constant 0 : i32
    %c0_i32_1 = arith.constant 0 : i32
    return %arg0, %c0_i32, %c0_i32_0 : i32, i32, i32
  }
}

module attributes {stable_mosaic.version = 11 : i64} {
  func.func @_bn_elu_pool_kernel(%arg0: i32, %arg1: memref<1x18x32xf32, #tpu.memory_space<vmem>>, %arg2: memref<1x32xf32, #tpu.memory_space<vmem>>, %arg3: memref<1x32xf32, #tpu.memory_space<vmem>>, %arg4: memref<1x9x32xf32, #tpu.memory_space<vmem>>) attributes {dimension_semantics = [#tpu.dimension_semantics<parallel>], iteration_bounds = array<i64: 2>, scalar_prefetch = 0 : i64, scratch_operands = 0 : i64, tpu.core_type = #tpu.core_type<tc>, window_params = [{transform_indices = @transform_0, window_bounds = array<i64: 1, 18, 32>}, {pipeline_mode = #tpu.pipeline_mode<synchronous>, transform_indices = @transform_1, window_bounds = array<i64: 1, 32>}, {pipeline_mode = #tpu.pipeline_mode<synchronous>, transform_indices = @transform_2, window_bounds = array<i64: 1, 32>}, {transform_indices = @transform_3, window_bounds = array<i64: 1, 9, 32>}]} {
    %c0 = arith.constant 0 : index
    %c0_0 = arith.constant 0 : index
    %c0_1 = arith.constant 0 : index
    %0 = vector.load %arg1[%c0, %c0_0, %c0_1] : memref<1x18x32xf32, #tpu.memory_space<vmem>>, vector<1x18x32xf32>
    %1 = vector.shape_cast %0 : vector<1x18x32xf32> to vector<18x32xf32>
    %c0_2 = arith.constant 0 : index
    %c0_3 = arith.constant 0 : index
    %2 = vector.load %arg2[%c0_2, %c0_3] : memref<1x32xf32, #tpu.memory_space<vmem>>, vector<1x32xf32>
    %3 = vector.broadcast %2 : vector<1x32xf32> to vector<18x32xf32>
    %4 = arith.mulf %1, %3 : vector<18x32xf32>
    %c0_4 = arith.constant 0 : index
    %c0_5 = arith.constant 0 : index
    %5 = vector.load %arg3[%c0_4, %c0_5] : memref<1x32xf32, #tpu.memory_space<vmem>>, vector<1x32xf32>
    %6 = vector.broadcast %5 : vector<1x32xf32> to vector<18x32xf32>
    %7 = arith.addf %4, %6 : vector<18x32xf32>
    %cst = arith.constant 0.000000e+00 : f32
    %8 = vector.broadcast %cst : f32 to vector<18x32xf32>
    %9 = arith.cmpf ogt, %7, %8 : vector<18x32xf32>
    %cst_6 = arith.constant 0.000000e+00 : f32
    %10 = vector.broadcast %cst_6 : f32 to vector<18x32xf32>
    %11 = arith.minimumf %7, %10 : vector<18x32xf32>
    %12 = math.exp %11 : vector<18x32xf32>
    %cst_7 = arith.constant 1.000000e+00 : f32
    %13 = vector.broadcast %cst_7 : f32 to vector<18x32xf32>
    %14 = arith.subf %12, %13 : vector<18x32xf32>
    %15 = arith.select %9, %7, %14 : vector<18x32xi1>, vector<18x32xf32>
    %cst_8 = arith.constant 0xFF800000 : f32
    %16 = vector.broadcast %cst_8 : f32 to vector<1x32xf32>
    %17 = tpu.concatenate %16, %15, %16 in 0 : vector<1x32xf32>, vector<18x32xf32>, vector<1x32xf32> -> vector<20x32xf32>
    %18 = vector.extract_strided_slice %17 {offsets = [0, 0], sizes = [18, 32], strides = [1, 1]} : vector<20x32xf32> to vector<18x32xf32>
    %19 = vector.extract_strided_slice %17 {offsets = [1, 0], sizes = [18, 32], strides = [1, 1]} : vector<20x32xf32> to vector<18x32xf32>
    %20 = arith.maximumf %18, %19 : vector<18x32xf32>
    %21 = vector.extract_strided_slice %17 {offsets = [2, 0], sizes = [18, 32], strides = [1, 1]} : vector<20x32xf32> to vector<18x32xf32>
    %22 = arith.maximumf %20, %21 : vector<18x32xf32>
    %23 = tpu.iota {dimensions = array<i32: 0>} : vector<9x18xi32>
    %24 = tpu.iota {dimensions = array<i32: 1>} : vector<9x18xi32>
    %c2_i32 = arith.constant 2 : i32
    %25 = vector.broadcast %c2_i32 : i32 to vector<9x18xi32>
    %26 = arith.muli %25, %23 : vector<9x18xi32>
    %27 = arith.cmpi eq, %24, %26 : vector<9x18xi32>
    %28 = arith.extui %27 : vector<9x18xi1> to vector<9x18xi32>
    %29 = arith.sitofp %28 : vector<9x18xi32> to vector<9x18xf32>
    %cst_9 = arith.constant dense<0.000000e+00> : vector<9x32xf32>
    %30 = tpu.matmul %29, %22, %cst_9 {dimension_numbers = #tpu.dot_dimension_numbers<[1], [0], [0], [1], [0, 0, 1, 1], [], []>} : vector<9x18xf32>, vector<18x32xf32>, vector<9x32xf32> -> vector<9x32xf32>
    %c0_10 = arith.constant 0 : index
    %c0_11 = arith.constant 0 : index
    %c0_12 = arith.constant 0 : index
    %31 = vector.load %arg4[%c0_10, %c0_11, %c0_12] : memref<1x9x32xf32, #tpu.memory_space<vmem>>, vector<1x9x32xf32>
    %32 = vector.shape_cast %31 : vector<1x9x32xf32> to vector<9x32xf32>
    %33 = vector.shape_cast %30 : vector<9x32xf32> to vector<1x9x32xf32>
    tpu.vector_store %arg4[%c0_10, %c0_11, %c0_12], %33 {strides = array<i32>} : memref<1x9x32xf32, #tpu.memory_space<vmem>>, vector<1x9x32xf32>,
    return
  }
  func.func @transform_0(%arg0: i32) -> (i32, i32, i32) {
    %c0_i32 = arith.constant 0 : i32
    %c0_i32_0 = arith.constant 0 : i32
    %c0_i32_1 = arith.constant 0 : i32
    return %arg0, %c0_i32, %c0_i32_0 : i32, i32, i32
  }
  func.func @transform_1(%arg0: i32) -> (i32, i32) {
    %c0_i32 = arith.constant 0 : i32
    %c0_i32_0 = arith.constant 0 : i32
    %c0_i32_1 = arith.constant 0 : i32
    return %c0_i32, %c0_i32_0 : i32, i32
  }
  func.func @transform_2(%arg0: i32) -> (i32, i32) {
    %c0_i32 = arith.constant 0 : i32
    %c0_i32_0 = arith.constant 0 : i32
    %c0_i32_1 = arith.constant 0 : i32
    return %c0_i32, %c0_i32_0 : i32, i32
  }
  func.func @transform_3(%arg0: i32) -> (i32, i32, i32) {
    %c0_i32 = arith.constant 0 : i32
    %c0_i32_0 = arith.constant 0 : i32
    %c0_i32_1 = arith.constant 0 : i32
    return %arg0, %c0_i32, %c0_i32_0 : i32, i32, i32
  }
}

</mosaic_0001>

<llo_original>
// kernel: conv_layer_forward.2
$region0: #{conv_layer_forward.2}
  #allocation0 [shape = 'u32[]', space=smem, size = 0x4, offset = 0x4, fixed_abs, tag = 'smem constant byte address 0x4 - core index']
  #allocation1 [shape = 'u32[144,128]{1,0:T(1,128)}', space=vmem, size = 0x12000, scoped, tag = 'internal scratch']
  %s0 = inlined_call_operand.vmem [shape: f32[2,20,32], index: 0, kind: input, shape index: {}]
  %s1 = inlined_call_operand.vmem [shape: f32[3,32,32], index: 1, kind: input, shape index: {}]
  %s2 = inlined_call_operand.vmem [shape: f32[1,32], index: 2, kind: input, shape index: {}]
  %s3 = inlined_call_operand.vmem [shape: f32[2,18,32], index: 3, kind: output, shape index: {0}]
  %s4 = inlined_call_operand.vmem [shape: f32[2,1,32], index: 4, kind: output, shape index: {1}]
  %s5 = inlined_call_operand.vmem [shape: f32[2,1,32], index: 5, kind: output, shape index: {2}]
  %6 = xla_tuple %s3, %s4, %s5
  %s7 = sld [smem:[#allocation0]]
  $region61: #{conv_layer_forward.2} parent=0
    _
  %s9 = ssub.s32 1, %s7
  %s10 = scalar_select 0, %s9, %s7
  loop: start=0, step=1, limit=4
  $region2: #{conv_layer_forward.2} parent=0 // loop_pre_header
    _
  $region3: #{conv_layer_forward.2} parent=0 // loop_header
    %s12 = sphi 0, %s16
    %p13 = scmp.ge.s32.totalorder %s12, 4
    %s22 = sphi 0, %s24
    %s25 = sphi 0, %s22
    %s26 = sphi 0, %s25
    %s42 = sphi 0, %s26
    %s46 = sphi 0, %s46
    %s48 = sphi 0, %s46
    %s49 = sphi 0, %s48
    %s63 = sphi 0, %s49
    %s67 = sphi 0, %s67
    %s69 = sphi 0, %s67
    %s70 = sphi 0, %s69
    %s84 = sphi 0, %s70
    %s90 = sphi 0, %s92
    %s93 = sphi 0, %s90
    %s94 = sphi 0, %s93
    %s110 = sphi 0, %s94
    %s116 = sphi 0, %s118
    %s119 = sphi 0, %s116
    %s120 = sphi 0, %s119
    %s136 = sphi 0, %s120
    %s142 = sphi 0, %s144
    %s145 = sphi 0, %s142
    %s146 = sphi 0, %s145
    %s162 = sphi 0, %s146
  $region4: #{conv_layer_forward.2} parent=0 // loop_header_branch
    %15 = sbr.rel (%p13) target = $region8
  $region5: #{conv_layer_forward.2} parent=0 // loop_body
    %s17 = ssub.s32 %s12, 1
    %s18 = ssub.s32 %s12, 2
    %s19 = sadd.s32 %s12, 1
    %s20 = ssub.s32 %s12, %s19
    %p21 = scmp.eq.s32.totalorder %s20, 0
    %s23 = sadd.s32 %s22, 1
    %s24 = scalar_select %p21, %s22, %s23
    %p27 = pneg %p21
    %p28 = scmp.eq.s32.totalorder %s12, 1
    %p29 = por %p27, %p28
    %p30 = scmp.ne.s32.totalorder %s22, %s25
    %p31 = scmp.eq.s32.totalorder %s12, 0
    %p32 = por %p30, %p31
    %p33 = scmp.ne.s32.totalorder %s22, %s25
    %p34 = scmp.eq.s32.totalorder %s17, 1
    %p35 = por %p33, %p34
    %p36 = scmp.ne.s32.totalorder %s25, %s26
    %p37 = scmp.eq.s32.totalorder %s17, 0
    %p38 = por %p36, %p37
    %p39 = scmp.ne.s32.totalorder %s25, %s26
    %p40 = scmp.eq.s32.totalorder %s18, 1
    %p41 = por %p39, %p40
    %p43 = scmp.ne.s32.totalorder %s26, %s42
    %p44 = scmp.eq.s32.totalorder %s18, 0
    %p45 = por %p43, %p44
    %s47 = sadd.s32 %s46, 1
    %p50 = scmp.eq.s32.totalorder %s12, 1
    %p51 = scmp.ne.s32.totalorder %s46, %s48
    %p52 = scmp.eq.s32.totalorder %s12, 0
    %p53 = por %p51, %p52
    %p54 = scmp.ne.s32.totalorder %s46, %s48
    %p55 = scmp.eq.s32.totalorder %s17, 1
    %p56 = por %p54, %p55
    %p57 = scmp.ne.s32.totalorder %s48, %s49
    %p58 = scmp.eq.s32.totalorder %s17, 0
    %p59 = por %p57, %p58
    %p60 = scmp.ne.s32.totalorder %s48, %s49
    %p61 = scmp.eq.s32.totalorder %s18, 1
    %p62 = por %p60, %p61
    %p64 = scmp.ne.s32.totalorder %s49, %s63
    %p65 = scmp.eq.s32.totalorder %s18, 0
    %p66 = por %p64, %p65
    %s68 = sadd.s32 %s67, 1
    %p71 = scmp.eq.s32.totalorder %s12, 1
    %p72 = scmp.ne.s32.totalorder %s67, %s69
    %p73 = scmp.eq.s32.totalorder %s12, 0
    %p74 = por %p72, %p73
    %p75 = scmp.ne.s32.totalorder %s67, %s69
    %p76 = scmp.eq.s32.totalorder %s17, 1
    %p77 = por %p75, %p76
    %p78 = scmp.ne.s32.totalorder %s69, %s70
    %p79 = scmp.eq.s32.totalorder %s17, 0
    %p80 = por %p78, %p79
    %p81 = scmp.ne.s32.totalorder %s69, %s70
    %p82 = scmp.eq.s32.totalorder %s18, 1
    %p83 = por %p81, %p82
    %p85 = scmp.ne.s32.totalorder %s70, %s84
    %p86 = scmp.eq.s32.totalorder %s18, 0
    %p87 = por %p85, %p86
    %s88 = ssub.s32 %s12, %s19
    %p89 = scmp.eq.s32.totalorder %s88, 0
    %s91 = sadd.s32 %s90, 1
    %s92 = scalar_select %p89, %s90, %s91
    %p95 = pneg %p89
    %p96 = scmp.eq.s32.totalorder %s12, 1
    %p97 = por %p95, %p96
    %p98 = scmp.ne.s32.totalorder %s90, %s93
    %p99 = scmp.eq.s32.totalorder %s12, 0
    %p100 = por %p98, %p99
    %p101 = scmp.ne.s32.totalorder %s90, %s93
    %p102 = scmp.eq.s32.totalorder %s17, 1
    %p103 = por %p101, %p102
    %p104 = scmp.ne.s32.totalorder %s93, %s94
    %p105 = scmp.eq.s32.totalorder %s17, 0
    %p106 = por %p104, %p105
    %p107 = scmp.ne.s32.totalorder %s93, %s94
    %p108 = scmp.eq.s32.totalorder %s18, 1
    %p109 = por %p107, %p108
    %p111 = scmp.ne.s32.totalorder %s94, %s110
    %p112 = scmp.eq.s32.totalorder %s18, 0
    %p113 = por %p111, %p112
    %s114 = ssub.s32 %s12, %s19
    %p115 = scmp.eq.s32.totalorder %s114, 0
    %s117 = sadd.s32 %s116, 1
    %s118 = scalar_select %p115, %s116, %s117
    %p121 = pneg %p115
    %p122 = scmp.eq.s32.totalorder %s12, 1
    %p123 = por %p121, %p122
    %p124 = scmp.ne.s32.totalorder %s116, %s119
    %p125 = scmp.eq.s32.totalorder %s12, 0
    %p126 = por %p124, %p125
    %p127 = scmp.ne.s32.totalorder %s116, %s119
    %p128 = scmp.eq.s32.totalorder %s17, 1
    %p129 = por %p127, %p128
    %p130 = scmp.ne.s32.totalorder %s119, %s120
    %p131 = scmp.eq.s32.totalorder %s17, 0
    %p132 = por %p130, %p131
    %p133 = scmp.ne.s32.totalorder %s119, %s120
    %p134 = scmp.eq.s32.totalorder %s18, 1
    %p135 = por %p133, %p134
    %p137 = scmp.ne.s32.totalorder %s120, %s136
    %p138 = scmp.eq.s32.totalorder %s18, 0
    %p139 = por %p137, %p138
    %s140 = ssub.s32 %s12, %s19
    %p141 = scmp.eq.s32.totalorder %s140, 0
    %s143 = sadd.s32 %s142, 1
    %s144 = scalar_select %p141, %s142, %s143
    %p147 = pneg %p141
    %p148 = scmp.eq.s32.totalorder %s12, 1
    %p149 = por %p147, %p148
    %p150 = scmp.ne.s32.totalorder %s142, %s145
    %p151 = scmp.eq.s32.totalorder %s12, 0
    %p152 = por %p150, %p151
    %p153 = scmp.ne.s32.totalorder %s142, %s145
    %p154 = scmp.eq.s32.totalorder %s17, 1
    %p155 = por %p153, %p154
    %p156 = scmp.ne.s32.totalorder %s145, %s146
    %p157 = scmp.eq.s32.totalorder %s17, 0
    %p158 = por %p156, %p157
    %p159 = scmp.ne.s32.totalorder %s145, %s146
    %p160 = scmp.eq.s32.totalorder %s18, 1
    %p161 = por %p159, %p160
    %p163 = scmp.ne.s32.totalorder %s146, %s162
    %p164 = scmp.eq.s32.totalorder %s18, 0
    %p165 = por %p163, %p164
    %p166 = scmp.le.s32.totalorder 1, %s12
    %p167 = scmp.lt.s32.totalorder %s12, 3
    %p168 = pnand %p166, %p167
    %p169 = pneg %p168
    // Predicated region
    $region9: #{conv_layer_forward.2} parent=5 // pred_check
      _
    $region10: #{conv_layer_forward.2} parent=5 // pred_check_branch
      %171 = sbr.rel (%p168) target = $region12
    $region11: #{conv_layer_forward.2} parent=5 // pred_region
      %s172 = ssub.s32 %s12, 1
      // Predicated region
      $region13: #{conv_layer_forward.2} parent=11 // pred_check
        %p173 = pneg %p59
      $region14: #{conv_layer_forward.2} parent=11 // pred_check_branch
        %175 = sbr.rel (%p173) target = $region16
      $region15: #{conv_layer_forward.2} parent=11 // pred_region
        _
      $region16: #{conv_layer_forward.2} parent=11 // pred_fallthru
        _
      // Predicated region
      $region17: #{conv_layer_forward.2} parent=11 // pred_check
        %p176 = pneg %p80
      $region18: #{conv_layer_forward.2} parent=11 // pred_check_branch
        %178 = sbr.rel (%p176) target = $region20
      $region19: #{conv_layer_forward.2} parent=11 // pred_region
        _
      $region20: #{conv_layer_forward.2} parent=11 // pred_fallthru
        _
    $region12: #{conv_layer_forward.2} parent=5 // pred_fallthru
      _
    %p179 = scmp.lt.s32.totalorder %s12, 2
    // Predicated region
    $region21: #{conv_layer_forward.2} parent=5 // pred_check
      %p180 = pneg %p179
    $region22: #{conv_layer_forward.2} parent=5 // pred_check_branch
      %182 = sbr.rel (%p180) target = $region24
    $region23: #{conv_layer_forward.2} parent=5 // pred_region
      // Predicated region
      $region25: #{conv_layer_forward.2} parent=23 // pred_check
        %p183 = pneg %p32
      $region26: #{conv_layer_forward.2} parent=23 // pred_check_branch
        %185 = sbr.rel (%p183) target = $region28
      $region27: #{conv_layer_forward.2} parent=23 // pred_region
        %p186 = scmp.lt.s32.totalorder %s12, 1
        %s187 = scalar_select %p186, %s12, 1
        %s188 = smul.addr %s187, 3
        %s189 = smul.addr %s188, 8
        %s190 = scalar_lea.vmem %s0, %s189
      $region28: #{conv_layer_forward.2} parent=23 // pred_fallthru
        _
    $region24: #{conv_layer_forward.2} parent=5 // pred_fallthru
      _
    %p191 = scmp.le.s32.totalorder 1, %s12
    %p192 = scmp.lt.s32.totalorder %s12, 3
    %p193 = pnand %p191, %p192
    %p194 = pneg %p193
    // Predicated region
    $region29: #{conv_layer_forward.2} parent=5 // pred_check
      _
    $region30: #{conv_layer_forward.2} parent=5 // pred_check_branch
      %196 = sbr.rel (%p193) target = $region32
    $region31: #{conv_layer_forward.2} parent=5 // pred_region
      %s197 = ssub.s32 %s12, 1
      %p198 = scmp.lt.s32.totalorder %s17, 1
      %s199 = scalar_select %p198, %s17, 1
      %s200 = smul.addr %s199, 3
      %s201 = smul.addr %s200, 8
      %s202 = scalar_lea.vmem %s0, %s201
      %p203 = pneg %p38
      %p204 = pneg %p35
      %p205 = pneg %p59
      %p206 = pneg %p56
      %p207 = pneg %p80
      %p208 = pneg %p77
      %p209 = pneg %p106
      %p210 = pneg %p103
      %p211 = scmp.lt.s32.totalorder %s17, 1
      %s212 = scalar_select %p211, %s17, 1
      %s213 = smul.addr %s212, 3
      %s214 = smul.addr %s213, 8
      %s215 = scalar_lea.vmem %s3, %s214
      %p216 = pneg %p132
      %p217 = pneg %p129
      %p218 = scmp.lt.s32.totalorder %s17, 1
      %s219 = scalar_select %p218, %s17, 1
      %s220 = scalar_lea.vmem %s4, %s219
      %p221 = pneg %p158
      %p222 = pneg %p155
      %p223 = scmp.lt.s32.totalorder %s17, 1
      %s224 = scalar_select %p223, %s17, 1
      %s225 = scalar_lea.vmem %s5, %s224
      %p226 = scmp.lt.s32.totalorder %s17, 1
      %s227 = scalar_select %p226, %s17, 1
      %s228 = smul.addr %s227, 3
      %s229 = smul.addr %s228, 8
      %s230 = scalar_lea.vmem %s0, %s229
      %p231 = scmp.lt.s32.totalorder %s17, 1
      %s232 = scalar_select %p231, %s17, 1
      %s233 = smul.addr %s232, 3
      %s234 = smul.addr %s233, 8
      %s235 = scalar_lea.vmem %s3, %s234
      %p236 = scmp.lt.s32.totalorder %s17, 1
      %s237 = scalar_select %p236, %s17, 1
      %s238 = scalar_lea.vmem %s4, %s237
      %p239 = scmp.lt.s32.totalorder %s17, 1
      %s240 = scalar_select %p239, %s17, 1
      %s241 = scalar_lea.vmem %s5, %s240
      %v242 = vld [vmem:[%s230] sm:$0xff]
      %v243 = vld [vmem:[%s230 + $0x8] sm:$0xff]
      %v244 = vld [vmem:[%s230 + $0x10] sm:$0x3]
      %v245 = vld [vmem:[%s1] sm:$0xff]
      %v246 = vld [vmem:[%s1 + $0x8] sm:$0xff]
      %v247 = vld [vmem:[%s1 + $0x10] sm:$0xff]
      %v248 = vld [vmem:[%s1 + $0x18] sm:$0xff]
      %v249 = vld [vmem:[%s230 + $0x1] sm:$0xff]
      %v250 = vld [vmem:[%s230 + $0x9] sm:$0xff]
      %v251 = vld [vmem:[%s230 + $0x11] sm:$0x3]
      %s252 = scalar_lea.vmem %s1, 32
      %v253 = vld [vmem:[%s252] sm:$0xff]
      %v254 = vld [vmem:[%s252 + $0x8] sm:$0xff]
      %v255 = vld [vmem:[%s252 + $0x10] sm:$0xff]
      %v256 = vld [vmem:[%s252 + $0x18] sm:$0xff]
      %vm257 = vcmask 261120
      %v259 = vsel %vm257, %v249, 0
      %v262 = vsel %vm257, %v250, 0
      %v265 = vsel %vm257, %v251, 0
      %267 = vmatprep.subr.mxu0 0.0
      %268 = vmatpush1.msra.mxu0 %v253
      %269 = vmatprep.subr.mxu0 0.0
      %270 = vmatpush1.msra.mxu0 %v254
      %271 = vmatprep.subr.mxu0 0.0
      %272 = vmatpush1.msra.mxu0 %v255
      %273 = vmatprep.subr.mxu0 0.0
      %274 = vmatpush1.msra.mxu0 %v256
      %275 = vmatprep.subr.mxu0 0.0
      %276 = vmatpush1.msra.mxu0 0.0
      %277 = vmatprep.subr.mxu0 0.0
      %278 = vmatpush1.msra.mxu0 0.0
      %279 = vmatprep.subr.mxu0 0.0
      %280 = vmatpush1.msra.mxu0 0.0
      %281 = vmatprep.subr.mxu0 0.0
      %282 = vmatpush1.msra.mxu0 0.0
      %283 = vmatprep.subr.mxu0 0.0
      %284 = vmatpush1.msra.mxu0 0.0
      %285 = vmatprep.subr.mxu0 0.0
      %286 = vmatpush1.msra.mxu0 0.0
      %287 = vmatprep.subr.mxu0 0.0
      %288 = vmatpush1.msra.mxu0 0.0
      %289 = vmatprep.subr.mxu0 0.0
      %290 = vmatpush1.msra.mxu0 0.0
      %291 = vmatprep.subr.mxu0 0.0
      %292 = vmatpush1.msra.mxu0 0.0
      %293 = vmatprep.subr.mxu0 0.0
      %294 = vmatpush1.msra.mxu0 0.0
      %295 = vmatprep.subr.mxu0 0.0
      %296 = vmatpush1.msra.mxu0 0.0
      %297 = vmatprep.subr.mxu0 0.0
      %298 = vmatpush1.msra.mxu0 0.0
      %299 = vmatprep.subr.mxu0 0.0
      %300 = vmatpush1.msra.mxu0 0.0
      %301 = vmatprep.subr.mxu0 0.0
      %302 = vmatpush1.msra.mxu0 0.0
      %303 = vmatprep.subr.mxu0 0.0
      %304 = vmatpush1.msra.mxu0 0.0
      %305 = vmatprep.subr.mxu0 0.0
      %306 = vmatpush1.msra.mxu0 0.0
      %307 = vmatprep.subr.mxu0 0.0
      %308 = vmatpush1.msra.mxu0 0.0
      %309 = vmatprep.subr.mxu0 0.0
      %310 = vmatpush1.msra.mxu0 0.0
      %311 = vmatprep.subr.mxu0 0.0
      %312 = vmatpush1.msra.mxu0 0.0
      %313 = vmatprep.subr.mxu0 0.0
      %314 = vmatpush1.msra.mxu0 0.0
      %315 = vmatprep.subr.mxu0 0.0
      %316 = vmatpush1.msra.mxu0 0.0
      %317 = vmatprep.subr.mxu0 0.0
      %318 = vmatpush1.msra.mxu0 0.0
      %319 = vmatprep.subr.mxu0 0.0
      %320 = vmatpush1.msra.mxu0 0.0
      %321 = vmatprep.subr.mxu0 0.0
      %322 = vmatpush1.msra.mxu0 0.0
      %323 = vmatprep.subr.mxu0 0.0
      %324 = vmatpush1.msra.mxu0 0.0
      %325 = vmatprep.subr.mxu0 0.0
      %326 = vmatpush1.msra.mxu0 0.0
      %327 = vmatprep.subr.mxu0 0.0
      %328 = vmatpush1.msra.mxu0 0.0
      %329 = vmatprep.subr.mxu0 0.0
      %330 = vmatpush1.msra.mxu0 0.0
      %331 = vmatprep.mubr.f32.mxu0 0.0
      %332 = vmatmul.mubr.f32.gmra.mrb[0].mxu0 %v259
      %v333 = vpop.f32.mrb[0].mxu0
      %v334 = vadd.f32 0.0, %v333
      %v335 = vpop.f32.mrb[0].mxu0
      %336 = vmatprep.mubr.f32.mxu0 0.0
      %337 = vmatmul.mubr.f32.gmra.mrb[0].mxu0 %v262
      %v338 = vpop.f32.mrb[0].mxu0
      %v339 = vadd.f32 0.0, %v338
      %v340 = vpop.f32.mrb[0].mxu0
      %341 = vmatprep.mubr.f32.mxu0 0.0
      %342 = vmatmul.mubr.f32.gmra.mrb[0].mxu0 %v265
      %v343 = vpop.f32.mrb[0].mxu0
      %v344 = vadd.f32 0.0, %v343
      %v345 = vpop.f32.mrb[0].mxu0
      %346 = vdwg.mxu0
      %v348 = vsel %vm257, %v242, 0
      %v351 = vsel %vm257, %v243, 0
      %v354 = vsel %vm257, %v244, 0
      %356 = vmatprep.subr.mxu0 0.0
      %357 = vmatpush1.msra.mxu0 %v245
      %358 = vmatprep.subr.mxu0 0.0
      %359 = vmatpush1.msra.mxu0 %v246
      %360 = vmatprep.subr.mxu0 0.0
      %361 = vmatpush1.msra.mxu0 %v247
      %362 = vmatprep.subr.mxu0 0.0
      %363 = vmatpush1.msra.mxu0 %v248
      %364 = vmatprep.subr.mxu0 0.0
      %365 = vmatpush1.msra.mxu0 0.0
      %366 = vmatprep.subr.mxu0 0.0
      %367 = vmatpush1.msra.mxu0 0.0
      %368 = vmatprep.subr.mxu0 0.0
      %369 = vmatpush1.msra.mxu0 0.0
      %370 = vmatprep.subr.mxu0 0.0
      %371 = vmatpush1.msra.mxu0 0.0
      %372 = vmatprep.subr.mxu0 0.0
      %373 = vmatpush1.msra.mxu0 0.0
      %374 = vmatprep.subr.mxu0 0.0
      %375 = vmatpush1.msra.mxu0 0.0
      %376 = vmatprep.subr.mxu0 0.0
      %377 = vmatpush1.msra.mxu0 0.0
      %378 = vmatprep.subr.mxu0 0.0
      %379 = vmatpush1.msra.mxu0 0.0
      %380 = vmatprep.subr.mxu0 0.0
      %381 = vmatpush1.msra.mxu0 0.0
      %382 = vmatprep.subr.mxu0 0.0
      %383 = vmatpush1.msra.mxu0 0.0
      %384 = vmatprep.subr.mxu0 0.0
      %385 = vmatpush1.msra.mxu0 0.0
      %386 = vmatprep.subr.mxu0 0.0
      %387 = vmatpush1.msra.mxu0 0.0
      %388 = vmatprep.subr.mxu0 0.0
      %389 = vmatpush1.msra.mxu0 0.0
      %390 = vmatprep.subr.mxu0 0.0
      %391 = vmatpush1.msra.mxu0 0.0
      %392 = vmatprep.subr.mxu0 0.0
      %393 = vmatpush1.msra.mxu0 0.0
      %394 = vmatprep.subr.mxu0 0.0
      %395 = vmatpush1.msra.mxu0 0.0
      %396 = vmatprep.subr.mxu0 0.0
      %397 = vmatpush1.msra.mxu0 0.0
      %398 = vmatprep.subr.mxu0 0.0
      %399 = vmatpush1.msra.mxu0 0.0
      %400 = vmatprep.subr.mxu0 0.0
      %401 = vmatpush1.msra.mxu0 0.0
      %402 = vmatprep.subr.mxu0 0.0
      %403 = vmatpush1.msra.mxu0 0.0
      %404 = vmatprep.subr.mxu0 0.0
      %405 = vmatpush1.msra.mxu0 0.0
      %406 = vmatprep.subr.mxu0 0.0
      %407 = vmatpush1.msra.mxu0 0.0
      %408 = vmatprep.subr.mxu0 0.0
      %409 = vmatpush1.msra.mxu0 0.0
      %410 = vmatprep.subr.mxu0 0.0
      %411 = vmatpush1.msra.mxu0 0.0
      %412 = vmatprep.subr.mxu0 0.0
      %413 = vmatpush1.msra.mxu0 0.0
      %414 = vmatprep.subr.mxu0 0.0
      %415 = vmatpush1.msra.mxu0 0.0
      %416 = vmatprep.subr.mxu0 0.0
      %417 = vmatpush1.msra.mxu0 0.0
      %418 = vmatprep.subr.mxu0 0.0
      %419 = vmatpush1.msra.mxu0 0.0
      %420 = vmatprep.mubr.f32.mxu0 0.0
      %421 = vmatmul.mubr.f32.gmra.mrb[0].mxu0 %v348
      %v422 = vpop.f32.mrb[0].mxu0
      %v423 = vadd.f32 %v334, %v422
      %v424 = vpop.f32.mrb[0].mxu0
      %425 = vmatprep.mubr.f32.mxu0 0.0
      %426 = vmatmul.mubr.f32.gmra.mrb[0].mxu0 %v351
      %v427 = vpop.f32.mrb[0].mxu0
      %v428 = vadd.f32 %v339, %v427
      %v429 = vpop.f32.mrb[0].mxu0
      %430 = vmatprep.mubr.f32.mxu0 0.0
      %431 = vmatmul.mubr.f32.gmra.mrb[0].mxu0 %v354
      %v432 = vpop.f32.mrb[0].mxu0
      %v433 = vadd.f32 %v344, %v432
      %v434 = vpop.f32.mrb[0].mxu0
      %435 = vdwg.mxu0
      %v436 = vld [vmem:[%s230 + $0x2] sm:$0xff]
      %v437 = vld [vmem:[%s230 + $0xa] sm:$0xff]
      %v438 = vld [vmem:[%s230 + $0x12] sm:$0x3]
      %s439 = scalar_lea.vmem %s1, 64
      %v440 = vld [vmem:[%s439] sm:$0xff]
      %v441 = vld [vmem:[%s439 + $0x8] sm:$0xff]
      %v442 = vld [vmem:[%s439 + $0x10] sm:$0xff]
      %v443 = vld [vmem:[%s439 + $0x18] sm:$0xff]
      %v445 = vsel %vm257, %v436, 0
      %v448 = vsel %vm257, %v437, 0
      %v451 = vsel %vm257, %v438, 0
      %453 = vmatprep.subr.mxu0 0.0
      %454 = vmatpush1.msra.mxu0 %v440
      %455 = vmatprep.subr.mxu0 0.0
      %456 = vmatpush1.msra.mxu0 %v441
      %457 = vmatprep.subr.mxu0 0.0
      %458 = vmatpush1.msra.mxu0 %v442
      %459 = vmatprep.subr.mxu0 0.0
      %460 = vmatpush1.msra.mxu0 %v443
      %461 = vmatprep.subr.mxu0 0.0
      %462 = vmatpush1.msra.mxu0 0.0
      %463 = vmatprep.subr.mxu0 0.0
      %464 = vmatpush1.msra.mxu0 0.0
      %465 = vmatprep.subr.mxu0 0.0
      %466 = vmatpush1.msra.mxu0 0.0
      %467 = vmatprep.subr.mxu0 0.0
      %468 = vmatpush1.msra.mxu0 0.0
      %469 = vmatprep.subr.mxu0 0.0
      %470 = vmatpush1.msra.mxu0 0.0
      %471 = vmatprep.subr.mxu0 0.0
      %472 = vmatpush1.msra.mxu0 0.0
      %473 = vmatprep.subr.mxu0 0.0
      %474 = vmatpush1.msra.mxu0 0.0
      %475 = vmatprep.subr.mxu0 0.0
      %476 = vmatpush1.msra.mxu0 0.0
      %477 = vmatprep.subr.mxu0 0.0
      %478 = vmatpush1.msra.mxu0 0.0
      %479 = vmatprep.subr.mxu0 0.0
      %480 = vmatpush1.msra.mxu0 0.0
      %481 = vmatprep.subr.mxu0 0.0
      %482 = vmatpush1.msra.mxu0 0.0
      %483 = vmatprep.subr.mxu0 0.0
      %484 = vmatpush1.msra.mxu0 0.0
      %485 = vmatprep.subr.mxu0 0.0
      %486 = vmatpush1.msra.mxu0 0.0
      %487 = vmatprep.subr.mxu0 0.0
      %488 = vmatpush1.msra.mxu0 0.0
      %489 = vmatprep.subr.mxu0 0.0
      %490 = vmatpush1.msra.mxu0 0.0
      %491 = vmatprep.subr.mxu0 0.0
      %492 = vmatpush1.msra.mxu0 0.0
      %493 = vmatprep.subr.mxu0 0.0
      %494 = vmatpush1.msra.mxu0 0.0
      %495 = vmatprep.subr.mxu0 0.0
      %496 = vmatpush1.msra.mxu0 0.0
      %497 = vmatprep.subr.mxu0 0.0
      %498 = vmatpush1.msra.mxu0 0.0
      %499 = vmatprep.subr.mxu0 0.0
      %500 = vmatpush1.msra.mxu0 0.0
      %501 = vmatprep.subr.mxu0 0.0
      %502 = vmatpush1.msra.mxu0 0.0
      %503 = vmatprep.subr.mxu0 0.0
      %504 = vmatpush1.msra.mxu0 0.0
      %505 = vmatprep.subr.mxu0 0.0
      %506 = vmatpush1.msra.mxu0 0.0
      %507 = vmatprep.subr.mxu0 0.0
      %508 = vmatpush1.msra.mxu0 0.0
      %509 = vmatprep.subr.mxu0 0.0
      %510 = vmatpush1.msra.mxu0 0.0
      %511 = vmatprep.subr.mxu0 0.0
      %512 = vmatpush1.msra.mxu0 0.0
      %513 = vmatprep.subr.mxu0 0.0
      %514 = vmatpush1.msra.mxu0 0.0
      %515 = vmatprep.subr.mxu0 0.0
      %516 = vmatpush1.msra.mxu0 0.0
      %517 = vmatprep.mubr.f32.mxu0 0.0
      %518 = vmatmul.mubr.f32.gmra.mrb[0].mxu0 %v445
      %v519 = vpop.f32.mrb[0].mxu0
      %v520 = vadd.f32 0.0, %v519
      %v521 = vpop.f32.mrb[0].mxu0
      %522 = vmatprep.mubr.f32.mxu0 0.0
      %523 = vmatmul.mubr.f32.gmra.mrb[0].mxu0 %v448
      %v524 = vpop.f32.mrb[0].mxu0
      %v525 = vadd.f32 0.0, %v524
      %v526 = vpop.f32.mrb[0].mxu0
      %527 = vmatprep.mubr.f32.mxu0 0.0
      %528 = vmatmul.mubr.f32.gmra.mrb[0].mxu0 %v451
      %v529 = vpop.f32.mrb[0].mxu0
      %v530 = vadd.f32 0.0, %v529
      %v531 = vpop.f32.mrb[0].mxu0
      %532 = vdwg.mxu0
      %v533 = vadd.f32 %v423, %v520
      %v534 = vadd.f32 %v428, %v525
      %v535 = vadd.f32 %v433, %v530
      %v536 = vld [vmem:[%s2] sm:$0x1]
      %v538 = vlaneseq
      %v539 = vshrl.u32 %v538, 7
      %v540 = vsub.s32 0, %v539
      %v541 = vrot.slane %v536, %v540
      %v543 = vadd.f32 %v533, %v541
      %v544 = vadd.f32 %v534, %v541
      %v545 = vadd.f32 %v535, %v541
      %546 = vst.msk [vmem:[%s235] sm:$0xff] %vm257, %v543
      %547 = vst.msk [vmem:[%s235 + $0x8] sm:$0xff] %vm257, %v544
      %vm548 = vcmask 254976
      %549 = vst.msk [vmem:[%s235 + $0x10] sm:$0x3] %vm548, %v545
      %v550 = vsel %vm257, %v543, 0.0
      %v551 = vsel %vm257, %v544, 0.0
      %v552 = vadd.f32 %v550, %v551
      %v553 = vsel %vm548, %v545, 0.0
      %v554 = vadd.f32 %v552, %v553
      %v555 = vrot.slane %v554, 4
      %v556 = vadd.f32 %v554, %v555
      %v557 = vrot.slane %v556, 2
      %v558 = vadd.f32 %v556, %v557
      %v559 = vrot.slane %v558, 1
      %v560 = vadd.f32 %v558, %v559
      %vm561 = vcmask 253952
      %562 = vst.msk [vmem:[%s238] sm:$0x1] %vm561, %v560
      %v563 = vmul.f32 %v543, %v543
      %v564 = vmul.f32 %v544, %v544
      %v565 = vmul.f32 %v545, %v545
      %v566 = vsel %vm257, %v563, 0.0
      %v567 = vsel %vm257, %v564, 0.0
      %v568 = vadd.f32 %v566, %v567
      %v569 = vsel %vm548, %v565, 0.0
      %v570 = vadd.f32 %v568, %v569
      %v571 = vrot.slane %v570, 4
      %v572 = vadd.f32 %v570, %v571
      %v573 = vrot.slane %v572, 2
      %v574 = vadd.f32 %v572, %v573
      %v575 = vrot.slane %v574, 1
      %v576 = vadd.f32 %v574, %v575
      %577 = vst.msk [vmem:[%s241] sm:$0x1] %vm561, %v576
      %p578 = scmp.lt.s32.totalorder %s17, 1
      %s579 = scalar_select %p578, %s17, 1
      %s580 = smul.addr %s579, 3
      %s581 = smul.addr %s580, 8
      %s582 = scalar_lea.vmem %s3, %s581
      %p583 = scmp.lt.s32.totalorder %s17, 1
      %s584 = scalar_select %p583, %s17, 1
      %s585 = scalar_lea.vmem %s4, %s584
      %p586 = scmp.lt.s32.totalorder %s17, 1
      %s587 = scalar_select %p586, %s17, 1
      %s588 = scalar_lea.vmem %s5, %s587
      // Predicated region
      $region33: #{conv_layer_forward.2} parent=31 // pred_check
        %p589 = pneg %p103
      $region34: #{conv_layer_forward.2} parent=31 // pred_check_branch
        %591 = sbr.rel (%p589) target = $region36
      $region35: #{conv_layer_forward.2} parent=31 // pred_region
        _
      $region36: #{conv_layer_forward.2} parent=31 // pred_fallthru
        _
      // Predicated region
      $region37: #{conv_layer_forward.2} parent=31 // pred_check
        %p592 = pneg %p129
      $region38: #{conv_layer_forward.2} parent=31 // pred_check_branch
        %594 = sbr.rel (%p592) target = $region40
      $region39: #{conv_layer_forward.2} parent=31 // pred_region
        _
      $region40: #{conv_layer_forward.2} parent=31 // pred_fallthru
        _
      // Predicated region
      $region41: #{conv_layer_forward.2} parent=31 // pred_check
        %p595 = pneg %p155
      $region42: #{conv_layer_forward.2} parent=31 // pred_check_branch
        %597 = sbr.rel (%p595) target = $region44
      $region43: #{conv_layer_forward.2} parent=31 // pred_region
        _
      $region44: #{conv_layer_forward.2} parent=31 // pred_fallthru
        _
    $region32: #{conv_layer_forward.2} parent=5 // pred_fallthru
      _
    %p598 = scmp.le.s32.totalorder 2, %s12
    // Predicated region
    $region45: #{conv_layer_forward.2} parent=5 // pred_check
      %p599 = pneg %p598
    $region46: #{conv_layer_forward.2} parent=5 // pred_check_branch
      %601 = sbr.rel (%p599) target = $region48
    $region47: #{conv_layer_forward.2} parent=5 // pred_region
      %s602 = ssub.s32 %s12, 2
      // Predicated region
      $region49: #{conv_layer_forward.2} parent=47 // pred_check
        %p603 = pneg %p109
      $region50: #{conv_layer_forward.2} parent=47 // pred_check_branch
        %605 = sbr.rel (%p603) target = $region52
      $region51: #{conv_layer_forward.2} parent=47 // pred_region
        %p606 = scmp.lt.s32.totalorder %s18, 1
        %s607 = scalar_select %p606, %s18, 1
        %s608 = smul.addr %s607, 3
        %s609 = smul.addr %s608, 8
        %s610 = scalar_lea.vmem %s3, %s609
      $region52: #{conv_layer_forward.2} parent=47 // pred_fallthru
        _
      // Predicated region
      $region53: #{conv_layer_forward.2} parent=47 // pred_check
        %p611 = pneg %p135
      $region54: #{conv_layer_forward.2} parent=47 // pred_check_branch
        %613 = sbr.rel (%p611) target = $region56
      $region55: #{conv_layer_forward.2} parent=47 // pred_region
        %p614 = scmp.lt.s32.totalorder %s18, 1
        %s615 = scalar_select %p614, %s18, 1
        %s616 = scalar_lea.vmem %s4, %s615
      $region56: #{conv_layer_forward.2} parent=47 // pred_fallthru
        _
      // Predicated region
      $region57: #{conv_layer_forward.2} parent=47 // pred_check
        %p617 = pneg %p161
      $region58: #{conv_layer_forward.2} parent=47 // pred_check_branch
        %619 = sbr.rel (%p617) target = $region60
      $region59: #{conv_layer_forward.2} parent=47 // pred_region
        %p620 = scmp.lt.s32.totalorder %s18, 1
        %s621 = scalar_select %p620, %s18, 1
        %s622 = scalar_lea.vmem %s5, %s621
      $region60: #{conv_layer_forward.2} parent=47 // pred_fallthru
        _
    $region48: #{conv_layer_forward.2} parent=5 // pred_fallthru
      _
  $region6: #{conv_layer_forward.2} parent=0 // loop_footer
    %s16 = sadd.s32 1, %s12
  $region7: #{conv_layer_forward.2} parent=0 // loop_footer_branch
    %11 = sbr.rel target = $region3
  $region8: #{conv_layer_forward.2} parent=0 // loop_exit
    _

// kernel: conv_layer_forward.3
$region0: #{conv_layer_forward.3}
  #allocation0 [shape = 'u32[]', space=smem, size = 0x4, offset = 0x4, fixed_abs, tag = 'smem constant byte address 0x4 - core index']
  #allocation1 [shape = 'u32[144,128]{1,0:T(1,128)}', space=vmem, size = 0x12000, scoped, tag = 'internal scratch']
  %s0 = inlined_call_operand.vmem [shape: f32[2,18,32], index: 0, kind: input, shape index: {}]
  %s1 = inlined_call_operand.vmem [shape: f32[1,32], index: 1, kind: input, shape index: {}]
  %s2 = inlined_call_operand.vmem [shape: f32[1,32], index: 2, kind: input, shape index: {}]
  %s3 = inlined_call_operand.vmem [shape: f32[2,9,32], index: 3, kind: output, shape index: {}]
  %s4 = sld [smem:[#allocation0]]
  $region45: #{conv_layer_forward.3} parent=0
    _
  %s6 = ssub.s32 1, %s4
  %s7 = scalar_select 0, %s6, %s4
  loop: start=0, step=1, limit=4
  $region2: #{conv_layer_forward.3} parent=0 // loop_pre_header
    _
  $region3: #{conv_layer_forward.3} parent=0 // loop_header
    %s9 = sphi 0, %s13
    %p10 = scmp.ge.s32.totalorder %s9, 4
    %s19 = sphi 0, %s21
    %s22 = sphi 0, %s19
    %s23 = sphi 0, %s22
    %s39 = sphi 0, %s23
    %s43 = sphi 0, %s43
    %s45 = sphi 0, %s43
    %s46 = sphi 0, %s45
    %s60 = sphi 0, %s46
    %s64 = sphi 0, %s64
    %s66 = sphi 0, %s64
    %s67 = sphi 0, %s66
    %s81 = sphi 0, %s67
    %s87 = sphi 0, %s89
    %s90 = sphi 0, %s87
    %s91 = sphi 0, %s90
    %s107 = sphi 0, %s91
  $region4: #{conv_layer_forward.3} parent=0 // loop_header_branch
    %12 = sbr.rel (%p10) target = $region8
  $region5: #{conv_layer_forward.3} parent=0 // loop_body
    %s14 = ssub.s32 %s9, 1
    %s15 = ssub.s32 %s9, 2
    %s16 = sadd.s32 %s9, 1
    %s17 = ssub.s32 %s9, %s16
    %p18 = scmp.eq.s32.totalorder %s17, 0
    %s20 = sadd.s32 %s19, 1
    %s21 = scalar_select %p18, %s19, %s20
    %p24 = pneg %p18
    %p25 = scmp.eq.s32.totalorder %s9, 1
    %p26 = por %p24, %p25
    %p27 = scmp.ne.s32.totalorder %s19, %s22
    %p28 = scmp.eq.s32.totalorder %s9, 0
    %p29 = por %p27, %p28
    %p30 = scmp.ne.s32.totalorder %s19, %s22
    %p31 = scmp.eq.s32.totalorder %s14, 1
    %p32 = por %p30, %p31
    %p33 = scmp.ne.s32.totalorder %s22, %s23
    %p34 = scmp.eq.s32.totalorder %s14, 0
    %p35 = por %p33, %p34
    %p36 = scmp.ne.s32.totalorder %s22, %s23
    %p37 = scmp.eq.s32.totalorder %s15, 1
    %p38 = por %p36, %p37
    %p40 = scmp.ne.s32.totalorder %s23, %s39
    %p41 = scmp.eq.s32.totalorder %s15, 0
    %p42 = por %p40, %p41
    %s44 = sadd.s32 %s43, 1
    %p47 = scmp.eq.s32.totalorder %s9, 1
    %p48 = scmp.ne.s32.totalorder %s43, %s45
    %p49 = scmp.eq.s32.totalorder %s9, 0
    %p50 = por %p48, %p49
    %p51 = scmp.ne.s32.totalorder %s43, %s45
    %p52 = scmp.eq.s32.totalorder %s14, 1
    %p53 = por %p51, %p52
    %p54 = scmp.ne.s32.totalorder %s45, %s46
    %p55 = scmp.eq.s32.totalorder %s14, 0
    %p56 = por %p54, %p55
    %p57 = scmp.ne.s32.totalorder %s45, %s46
    %p58 = scmp.eq.s32.totalorder %s15, 1
    %p59 = por %p57, %p58
    %p61 = scmp.ne.s32.totalorder %s46, %s60
    %p62 = scmp.eq.s32.totalorder %s15, 0
    %p63 = por %p61, %p62
    %s65 = sadd.s32 %s64, 1
    %p68 = scmp.eq.s32.totalorder %s9, 1
    %p69 = scmp.ne.s32.totalorder %s64, %s66
    %p70 = scmp.eq.s32.totalorder %s9, 0
    %p71 = por %p69, %p70
    %p72 = scmp.ne.s32.totalorder %s64, %s66
    %p73 = scmp.eq.s32.totalorder %s14, 1
    %p74 = por %p72, %p73
    %p75 = scmp.ne.s32.totalorder %s66, %s67
    %p76 = scmp.eq.s32.totalorder %s14, 0
    %p77 = por %p75, %p76
    %p78 = scmp.ne.s32.totalorder %s66, %s67
    %p79 = scmp.eq.s32.totalorder %s15, 1
    %p80 = por %p78, %p79
    %p82 = scmp.ne.s32.totalorder %s67, %s81
    %p83 = scmp.eq.s32.totalorder %s15, 0
    %p84 = por %p82, %p83
    %s85 = ssub.s32 %s9, %s16
    %p86 = scmp.eq.s32.totalorder %s85, 0
    %s88 = sadd.s32 %s87, 1
    %s89 = scalar_select %p86, %s87, %s88
    %p92 = pneg %p86
    %p93 = scmp.eq.s32.totalorder %s9, 1
    %p94 = por %p92, %p93
    %p95 = scmp.ne.s32.totalorder %s87, %s90
    %p96 = scmp.eq.s32.totalorder %s9, 0
    %p97 = por %p95, %p96
    %p98 = scmp.ne.s32.totalorder %s87, %s90
    %p99 = scmp.eq.s32.totalorder %s14, 1
    %p100 = por %p98, %p99
    %p101 = scmp.ne.s32.totalorder %s90, %s91
    %p102 = scmp.eq.s32.totalorder %s14, 0
    %p103 = por %p101, %p102
    %p104 = scmp.ne.s32.totalorder %s90, %s91
    %p105 = scmp.eq.s32.totalorder %s15, 1
    %p106 = por %p104, %p105
    %p108 = scmp.ne.s32.totalorder %s91, %s107
    %p109 = scmp.eq.s32.totalorder %s15, 0
    %p110 = por %p108, %p109
    %p111 = scmp.le.s32.totalorder 1, %s9
    %p112 = scmp.lt.s32.totalorder %s9, 3
    %p113 = pnand %p111, %p112
    %p114 = pneg %p113
    // Predicated region
    $region9: #{conv_layer_forward.3} parent=5 // pred_check
      _
    $region10: #{conv_layer_forward.3} parent=5 // pred_check_branch
      %116 = sbr.rel (%p113) target = $region12
    $region11: #{conv_layer_forward.3} parent=5 // pred_region
      %s117 = ssub.s32 %s9, 1
      // Predicated region
      $region13: #{conv_layer_forward.3} parent=11 // pred_check
        %p118 = pneg %p56
      $region14: #{conv_layer_forward.3} parent=11 // pred_check_branch
        %120 = sbr.rel (%p118) target = $region16
      $region15: #{conv_layer_forward.3} parent=11 // pred_region
        _
      $region16: #{conv_layer_forward.3} parent=11 // pred_fallthru
        _
      // Predicated region
      $region17: #{conv_layer_forward.3} parent=11 // pred_check
        %p121 = pneg %p77
      $region18: #{conv_layer_forward.3} parent=11 // pred_check_branch
        %123 = sbr.rel (%p121) target = $region20
      $region19: #{conv_layer_forward.3} parent=11 // pred_region
        _
      $region20: #{conv_layer_forward.3} parent=11 // pred_fallthru
        _
    $region12: #{conv_layer_forward.3} parent=5 // pred_fallthru
      _
    %p124 = scmp.lt.s32.totalorder %s9, 2
    // Predicated region
    $region21: #{conv_layer_forward.3} parent=5 // pred_check
      %p125 = pneg %p124
    $region22: #{conv_layer_forward.3} parent=5 // pred_check_branch
      %127 = sbr.rel (%p125) target = $region24
    $region23: #{conv_layer_forward.3} parent=5 // pred_region
      // Predicated region
      $region25: #{conv_layer_forward.3} parent=23 // pred_check
        %p128 = pneg %p29
      $region26: #{conv_layer_forward.3} parent=23 // pred_check_branch
        %130 = sbr.rel (%p128) target = $region28
      $region27: #{conv_layer_forward.3} parent=23 // pred_region
        %p131 = scmp.lt.s32.totalorder %s9, 1
        %s132 = scalar_select %p131, %s9, 1
        %s133 = smul.addr %s132, 3
        %s134 = smul.addr %s133, 8
        %s135 = scalar_lea.vmem %s0, %s134
      $region28: #{conv_layer_forward.3} parent=23 // pred_fallthru
        _
    $region24: #{conv_layer_forward.3} parent=5 // pred_fallthru
      _
    %p136 = scmp.le.s32.totalorder 1, %s9
    %p137 = scmp.lt.s32.totalorder %s9, 3
    %p138 = pnand %p136, %p137
    %p139 = pneg %p138
    // Predicated region
    $region29: #{conv_layer_forward.3} parent=5 // pred_check
      _
    $region30: #{conv_layer_forward.3} parent=5 // pred_check_branch
      %141 = sbr.rel (%p138) target = $region32
    $region31: #{conv_layer_forward.3} parent=5 // pred_region
      %s142 = ssub.s32 %s9, 1
      %p143 = scmp.lt.s32.totalorder %s14, 1
      %s144 = scalar_select %p143, %s14, 1
      %s145 = smul.addr %s144, 3
      %s146 = smul.addr %s145, 8
      %s147 = scalar_lea.vmem %s0, %s146
      %p148 = pneg %p35
      %p149 = pneg %p32
      %p150 = pneg %p56
      %p151 = pneg %p53
      %p152 = pneg %p77
      %p153 = pneg %p74
      %p154 = pneg %p103
      %p155 = pneg %p100
      %p156 = scmp.lt.s32.totalorder %s14, 1
      %s157 = scalar_select %p156, %s14, 1
      %s158 = smul.addr %s157, 2
      %s159 = smul.addr %s158, 8
      %s160 = scalar_lea.vmem %s3, %s159
      %p161 = scmp.lt.s32.totalorder %s14, 1
      %s162 = scalar_select %p161, %s14, 1
      %s163 = smul.addr %s162, 3
      %s164 = smul.addr %s163, 8
      %s165 = scalar_lea.vmem %s0, %s164
      %p166 = scmp.lt.s32.totalorder %s14, 1
      %s167 = scalar_select %p166, %s14, 1
      %s168 = smul.addr %s167, 2
      %s169 = smul.addr %s168, 8
      %s170 = scalar_lea.vmem %s3, %s169
      %v171 = vld [vmem:[%s165] sm:$0xff]
      %v172 = vld [vmem:[%s165 + $0x8] sm:$0xff]
      %v173 = vld [vmem:[%s165 + $0x10] sm:$0x3]
      %v174 = vld [vmem:[%s1] sm:$0x1]
      %v176 = vlaneseq
      %v177 = vshrl.u32 %v176, 7
      %v178 = vsub.s32 0, %v177
      %v179 = vrot.slane %v174, %v178
      %v181 = vmul.f32 %v171, %v179
      %v182 = vmul.f32 %v172, %v179
      %v183 = vmul.f32 %v173, %v179
      %v184 = vld [vmem:[%s2] sm:$0x1]
      %v186 = vlaneseq
      %v187 = vshrl.u32 %v186, 7
      %v188 = vsub.s32 0, %v187
      %v189 = vrot.slane %v184, %v188
      %v191 = vadd.f32 %v181, %v189
      %v192 = vadd.f32 %v182, %v189
      %v193 = vadd.f32 %v183, %v189
      %vm194 = vcmp.gt.f32.partialorder %v191, 0.0
      %vm195 = vcmp.gt.f32.partialorder %v192, 0.0
      %vm196 = vcmp.gt.f32.partialorder %v193, 0.0
      %v197 = vmin.f32 %v191, 0.0
      %v198 = vmin.f32 %v192, 0.0
      %v199 = vmin.f32 %v193, 0.0
      %v200 = vmul.f32 %v197, 1.442695
      %v201 = vpow.pop %v200
      %v202 = vmul.f32 %v198, 1.442695
      %v203 = vpow.pop %v202
      %v204 = vmul.f32 %v199, 1.442695
      %v205 = vpow.pop %v204
      %v206 = vsub.f32 %v201, 1.0
      %v207 = vsub.f32 %v203, 1.0
      %v208 = vsub.f32 %v205, 1.0
      %v209 = vsel %vm194, %v191, %v206
      %v210 = vsel %vm195, %v192, %v207
      %v211 = vsel %vm196, %v193, %v208
      %vm215 = vcmask 1040384
      %v216 = vrot.slane %v209, 7
      %v217 = vrot.slane %v210, 7
      %v218 = vsel %vm215, %v216, %v217
      %v219 = vrot.slane %v211, 7
      %v220 = vsel %vm215, %v217, %v219
      %v224 = vsel %vm215, -inf, %v216
      %vm225 = vcmask 1042432
      %v226 = vsel %vm225, %v220, -inf
      %vm229 = vcmask 1046528
      %v230 = vrot.slane %v224, 1
      %v231 = vrot.slane %v218, 1
      %v232 = vsel %vm229, %v230, %v231
      %v233 = vrot.slane %v226, 1
      %v234 = vsel %vm229, %v231, %v233
      %v238 = vmax.f32 %v224, %v232
      %v239 = vmax.f32 %v218, %v234
      %v240 = vmax.f32 %v226, %v233
      %vm241 = vcmask 1045504
      %v242 = vrot.slane %v224, 2
      %v243 = vrot.slane %v218, 2
      %v244 = vsel %vm241, %v242, %v243
      %v245 = vrot.slane %v226, 2
      %v246 = vsel %vm241, %v243, %v245
      %v250 = vmax.f32 %v238, %v244
      %v251 = vmax.f32 %v239, %v246
      %v252 = vmax.f32 %v240, %v245
      %v253 = vlaneseq
      %v254 = vshrl.u32 %v253, 7
      %v255 = vadd.s32 %v254, 8
      %v256 = vlaneseq
      %v257 = vand.u32 %v256, 127
      %v258 = vmul.u32 %v254, 2
      %v259 = vmul.u32 %v255, 2
      %vm260 = vcmp.eq.s32.totalorder %v257, %v258
      %vm261 = vcmp.eq.s32.totalorder %v257, %v259
      %v262 = vsel %vm260, 1, 0
      %v263 = vsel %vm261, 1, 0
      %v264 = vcvt.s32.f32 %v262
      %v265 = vcvt.s32.f32 %v263
      %vm266 = vcmask 146432
      %v268 = vsel %vm266, %v264, 0
      %v271 = vsel %vm266, %v265, 0
      %vm273 = vcmask 1041408
      %v275 = vsel %vm273, %v252, 0
      %277 = vmatprep.subr.mxu0 0.0
      %278 = vmatpush1.msra.mxu0 %v250
      %279 = vmatprep.subr.mxu0 0.0
      %280 = vmatpush1.msra.mxu0 %v251
      %281 = vmatprep.subr.mxu0 0.0
      %282 = vmatpush1.msra.mxu0 %v275
      %283 = vmatprep.subr.mxu0 0.0
      %284 = vmatpush1.msra.mxu0 0.0
      %285 = vmatprep.subr.mxu0 0.0
      %286 = vmatpush1.msra.mxu0 0.0
      %287 = vmatprep.subr.mxu0 0.0
      %288 = vmatpush1.msra.mxu0 0.0
      %289 = vmatprep.subr.mxu0 0.0
      %290 = vmatpush1.msra.mxu0 0.0
      %291 = vmatprep.subr.mxu0 0.0
      %292 = vmatpush1.msra.mxu0 0.0
      %293 = vmatprep.subr.mxu0 0.0
      %294 = vmatpush1.msra.mxu0 0.0
      %295 = vmatprep.subr.mxu0 0.0
      %296 = vmatpush1.msra.mxu0 0.0
      %297 = vmatprep.subr.mxu0 0.0
      %298 = vmatpush1.msra.mxu0 0.0
      %299 = vmatprep.subr.mxu0 0.0
      %300 = vmatpush1.msra.mxu0 0.0
      %301 = vmatprep.subr.mxu0 0.0
      %302 = vmatpush1.msra.mxu0 0.0
      %303 = vmatprep.subr.mxu0 0.0
      %304 = vmatpush1.msra.mxu0 0.0
      %305 = vmatprep.subr.mxu0 0.0
      %306 = vmatpush1.msra.mxu0 0.0
      %307 = vmatprep.subr.mxu0 0.0
      %308 = vmatpush1.msra.mxu0 0.0
      %309 = vmatprep.subr.mxu0 0.0
      %310 = vmatpush1.msra.mxu0 0.0
      %311 = vmatprep.subr.mxu0 0.0
      %312 = vmatpush1.msra.mxu0 0.0
      %313 = vmatprep.subr.mxu0 0.0
      %314 = vmatpush1.msra.mxu0 0.0
      %315 = vmatprep.subr.mxu0 0.0
      %316 = vmatpush1.msra.mxu0 0.0
      %317 = vmatprep.subr.mxu0 0.0
      %318 = vmatpush1.msra.mxu0 0.0
      %319 = vmatprep.subr.mxu0 0.0
      %320 = vmatpush1.msra.mxu0 0.0
      %321 = vmatprep.subr.mxu0 0.0
      %322 = vmatpush1.msra.mxu0 0.0
      %323 = vmatprep.subr.mxu0 0.0
      %324 = vmatpush1.msra.mxu0 0.0
      %325 = vmatprep.subr.mxu0 0.0
      %326 = vmatpush1.msra.mxu0 0.0
      %327 = vmatprep.subr.mxu0 0.0
      %328 = vmatpush1.msra.mxu0 0.0
      %329 = vmatprep.subr.mxu0 0.0
      %330 = vmatpush1.msra.mxu0 0.0
      %331 = vmatprep.subr.mxu0 0.0
      %332 = vmatpush1.msra.mxu0 0.0
      %333 = vmatprep.subr.mxu0 0.0
      %334 = vmatpush1.msra.mxu0 0.0
      %335 = vmatprep.subr.mxu0 0.0
      %336 = vmatpush1.msra.mxu0 0.0
      %337 = vmatprep.subr.mxu0 0.0
      %338 = vmatpush1.msra.mxu0 0.0
      %339 = vmatprep.subr.mxu0 0.0
      %340 = vmatpush1.msra.mxu0 0.0
      %341 = vmatprep.mubr.f32.mxu0 0.0
      %342 = vmatmul.mubr.f32.gmra.mrb[0].mxu0 %v268
      %v343 = vpop.f32.mrb[0].mxu0
      %v344 = vadd.f32 0.0, %v343
      %v345 = vpop.f32.mrb[0].mxu0
      %346 = vmatprep.mubr.f32.mxu0 0.0
      %347 = vmatmul.mubr.f32.gmra.mrb[0].mxu0 %v271
      %v348 = vpop.f32.mrb[0].mxu0
      %v349 = vadd.f32 0.0, %v348
      %v350 = vpop.f32.mrb[0].mxu0
      %351 = vdwg.mxu0
      %vm352 = vcmask 261120
      %353 = vst.msk [vmem:[%s170] sm:$0xff] %vm352, %v344
      %vm354 = vcmask 253952
      %355 = vst.msk [vmem:[%s170 + $0x8] sm:$0x1] %vm354, %v349
      %p356 = scmp.lt.s32.totalorder %s14, 1
      %s357 = scalar_select %p356, %s14, 1
      %s358 = smul.addr %s357, 2
      %s359 = smul.addr %s358, 8
      %s360 = scalar_lea.vmem %s3, %s359
      // Predicated region
      $region33: #{conv_layer_forward.3} parent=31 // pred_check
        %p361 = pneg %p100
      $region34: #{conv_layer_forward.3} parent=31 // pred_check_branch
        %363 = sbr.rel (%p361) target = $region36
      $region35: #{conv_layer_forward.3} parent=31 // pred_region
        _
      $region36: #{conv_layer_forward.3} parent=31 // pred_fallthru
        _
    $region32: #{conv_layer_forward.3} parent=5 // pred_fallthru
      _
    %p364 = scmp.le.s32.totalorder 2, %s9
    // Predicated region
    $region37: #{conv_layer_forward.3} parent=5 // pred_check
      %p365 = pneg %p364
    $region38: #{conv_layer_forward.3} parent=5 // pred_check_branch
      %367 = sbr.rel (%p365) target = $region40
    $region39: #{conv_layer_forward.3} parent=5 // pred_region
      %s368 = ssub.s32 %s9, 2
      // Predicated region
      $region41: #{conv_layer_forward.3} parent=39 // pred_check
        %p369 = pneg %p106
      $region42: #{conv_layer_forward.3} parent=39 // pred_check_branch
        %371 = sbr.rel (%p369) target = $region44
      $region43: #{conv_layer_forward.3} parent=39 // pred_region
        %p372 = scmp.lt.s32.totalorder %s15, 1
        %s373 = scalar_select %p372, %s15, 1
        %s374 = smul.addr %s373, 2
        %s375 = smul.addr %s374, 8
        %s376 = scalar_lea.vmem %s3, %s375
      $region44: #{conv_layer_forward.3} parent=39 // pred_fallthru
        _
    $region40: #{conv_layer_forward.3} parent=5 // pred_fallthru
      _
  $region6: #{conv_layer_forward.3} parent=0 // loop_footer
    %s13 = sadd.s32 1, %s9
  $region7: #{conv_layer_forward.3} parent=0 // loop_footer_branch
    %8 = sbr.rel target = $region3
  $region8: #{conv_layer_forward.3} parent=0 // loop_exit
    _

</llo_original>
